<compile_context>
chip_gen: v6e
topology: v6e:2x2x1
jax: 0.10.0
libtpu: 0.0.40
codegen_flags: <defaults>
</compile_context>

<pallas_src>
import functools

import jax
import jax.numpy as jnp
from jax import lax
from jax.experimental import pallas as pl
from jax.experimental.pallas import tpu as pltpu


# -----------------------------------------------------------------------------
# Path A (default): composed-operator MXU matmul.
# -----------------------------------------------------------------------------
def _stack_matmul_kernel(m_ref, x_ref, o_ref):
    # m_ref : VMEM (HW, HW)   composed causal-conv operator, already transposed
    #                         so that out_row = x_row @ m
    # x_ref : VMEM (bt, HW)   batch tile of flattened images
    # o_ref : VMEM (bt, HW)
    o_ref[...] = jnp.dot(
        x_ref[...], m_ref[...],
        preferred_element_type=jnp.float32,
        precision=jax.lax.Precision.HIGHEST,   # keep ~f32 accuracy on the MXU
    )


# -----------------------------------------------------------------------------
# Path B (fallback for large HW): separable roll/mask evaluation of the taps.
# A 3x3 tap (di, dj) of the causally padded conv is a shift of the image
# down/right by (si, sj) = (2-di, 2-dj); on the flattened view that is a single
# lane roll by si*W + sj with the wrap region zeroed by (row>=si) & (col>=sj).
# Separable order: 2 column rolls (+ 2 column masks), 3 horizontal combos,
# 2 row rolls (+ 2 row masks)  ->  4 rolls + 4 mask muls per layer.
# -----------------------------------------------------------------------------
def _conv_roll_kernel(w_ref, x_ref, o_ref, *, n_layers, H, W):
    # w_ref : SMEM (n_layers * 9,) flattened 3x3 kernels (scalar reads)
    # x_ref : VMEM (bt, H*W)
    # o_ref : VMEM (bt, H*W)
    x = x_ref[...]
    HW = H * W

    # Lane-only masks, built once, shape (1, HW), f32; broadcast over the batch
    # (sublane) axis for free instead of materializing (bt, HW) planes.
    pos = lax.broadcasted_iota(jnp.int32, (1, HW), 1)
    col = pos % W
    colm1 = (col >= 1).astype(jnp.float32)
    colm2 = (col >= 2).astype(jnp.float32)
    rowm1 = (pos >= W).astype(jnp.float32)
    rowm2 = (pos >= 2 * W).astype(jnp.float32)

    def one_layer(l, x):
        base = l * 9
        # Column-shifted (masked) copies, shared by all three row combos.
        c1 = pltpu.roll(x, 1, axis=1) * colm1
        c2 = pltpu.roll(x, 2, axis=1) * colm2
        # Weight for shift (si, sj) is w[2-si, 2-sj]  ->  flat index 8-3*si-sj.
        h0 = w_ref[base + 8] * x + w_ref[base + 7] * c1 + w_ref[base + 6] * c2
        h1 = w_ref[base + 5] * x + w_ref[base + 4] * c1 + w_ref[base + 3] * c2
        h2 = w_ref[base + 2] * x + w_ref[base + 1] * c1 + w_ref[base + 0] * c2
        acc = h0
        acc = acc + pltpu.roll(h1, W, axis=1) * rowm1
        acc = acc + pltpu.roll(h2, 2 * W, axis=1) * rowm2
        return acc

    if n_layers <= 8:
        # small stacks: static unroll gives the LLO scheduler full visibility
        for l in range(n_layers):
            x = one_layer(l, x)
    else:
        # deep stacks: bound code size / vreg live ranges; unroll=2 lets the
        # scheduler overlap one layer's XLU rolls with its neighbor's VALU work
        x = lax.fori_loop(0, n_layers, one_layer, x, unroll=2)

    o_ref[...] = x


# -----------------------------------------------------------------------------
# Wrapper-side helpers.
# -----------------------------------------------------------------------------
def _apply_layers_ref(x_nchw, weights):
    """Apply the stack of causal convs (ConstantPad2d((2,0,2,0)) + valid 3x3)."""
    x = x_nchw.astype(jnp.float32)
    for l in range(weights.shape[0]):
        xp = jnp.pad(x, ((0, 0), (0, 0), (2, 0), (2, 0)))
        w = weights[l][None, None].astype(jnp.float32)   # (1,1,3,3) OIHW
        x = lax.conv_general_dilated(
            xp, w, window_strides=(1, 1), padding="VALID",
            dimension_numbers=("NCHW", "OIHW", "NCHW"),
            precision=jax.lax.Precision.HIGHEST)
        # precision=HIGHEST so the composed operator (and the reference) keep
        # full f32 accuracy.
    return x


def _compose_stack_matrix_T(weights, H, W):
    """Composed operator A (HW, HW) such that out_row = x_row @ A.

    Built with plain XLA by pushing the HW basis images through the layer
    stack: row k of the result is the flattened output of basis image k, i.e.
    the transpose of M_total = M_n @ ... @ M_1.
    """
    HW = H * W
    basis = jnp.eye(HW, dtype=jnp.float32).reshape(HW, 1, H, W)
    y = _apply_layers_ref(basis, weights)
    return y.reshape(HW, HW)


def _pick_batch_tile(B, per_row_bytes, resident_bytes):
    """Rows of the flattened (B, H*W) batch processed per grid step.

    Budget 8 MiB of VMEM (fits v5e's 16 MiB scoped default and v7x's 64 MiB
    physical with headroom), accounting for the resident operator/temporaries.
    Tiles smaller than the full batch are multiples of 8 (sublane tiling); for
    B >= 16 prefer an even grid count so both v7x TensorCores get work.
    """
    budget = 8 << 20
    avail = max(budget - resident_bytes, per_row_bytes * 8)
    max_rows = max(8, avail // per_row_bytes)
    divs = [d for d in range(1, B + 1) if B % d == 0]
    valid = [d for d in divs if (d == B or d % 8 == 0) and d <= max_rows]
    if not valid:
        valid = [d for d in divs if d % 8 == 0] or [B]
    if B >= 16:
        even = [d for d in valid if (B // d) % 2 == 0]
        if even:
            return max(even)
    return max(valid)


def model2_forward(x_nchw, weights, *, use_matmul=None):
    """weights: (n_layers, 3, 3) f32. Returns (flattened (B, H*W) output, logdet)."""
    B, C, H, W = x_nchw.shape
    assert C == 1, "Model2 is built with n_input_channels=1"
    n_layers = weights.shape[0]
    HW = H * W

    x = x_nchw.reshape(B, HW).astype(jnp.float32)        # lane-dense flattened view

    if use_matmul is None:
        # Use the MXU path while the composed (HW, HW) f32 operator is small
        # enough to sit comfortably in VMEM (<= 4 MiB, i.e. HW <= 1024).
        use_matmul = (HW * HW * 4) <= (4 << 20)

    if use_matmul:
        m_t = _compose_stack_matrix_T(weights, H, W)     # (HW, HW)
        bt = _pick_batch_tile(B, per_row_bytes=16 * HW,
                              resident_bytes=2 * 4 * HW * HW)
        grid = (B // bt,)
        y = pl.pallas_call(
            _stack_matmul_kernel,
            out_shape=jax.ShapeDtypeStruct((B, HW), jnp.float32),
            grid=grid,
            in_specs=[
                pl.BlockSpec((HW, HW), lambda i: (0, 0)),     # operator, resident
                pl.BlockSpec((bt, HW), lambda i: (i, 0)),     # batch tile
            ],
            out_specs=pl.BlockSpec((bt, HW), lambda i: (i, 0)),
            compiler_params=pltpu.CompilerParams(dimension_semantics=("parallel",)),
        )(m_t, x)
    else:
        w_flat = weights.reshape(n_layers * 9).astype(jnp.float32)
        # per-row: in/out double-buffered (16*HW) + ~8 live f32 temporaries (32*HW)
        bt = _pick_batch_tile(B, per_row_bytes=48 * HW, resident_bytes=16 * HW)
        grid = (B // bt,)
        kernel = functools.partial(_conv_roll_kernel, n_layers=n_layers, H=H, W=W)
        y = pl.pallas_call(
            kernel,
            out_shape=jax.ShapeDtypeStruct((B, HW), jnp.float32),
            grid=grid,
            in_specs=[
                pl.BlockSpec(memory_space=pltpu.MemorySpace.SMEM),  # weights
                pl.BlockSpec((bt, HW), lambda i: (i, 0)),           # batch tile
            ],
            out_specs=pl.BlockSpec((bt, HW), lambda i: (i, 0)),
            compiler_params=pltpu.CompilerParams(dimension_semantics=("parallel",)),
        )(w_flat, x)

    # InvertibleConv2d.forward returns logdet == 0 unconditionally (the init
    # constraint w[...,-1,-1] == 1 makes the true logdet zero as well).
    # TODO(synk): if weights ever drift from the unit-diagonal constraint, the
    # exact logdet is sum_l H*W*log|w[l,2,2]|.
    logdet = jnp.float32(0.0)
    return y, logdet


def _ref_forward(x_nchw, weights):
    """Pure-JAX reference: chained ConstantPad2d((2,0,2,0)) + Conv2d(1,1,3x3,valid)."""
    x = _apply_layers_ref(x_nchw, weights)
    return x.reshape(x.shape[0], -1)


def _check(name, out, ref, atol, rtol):
    err = float(jnp.max(jnp.abs(out - ref)))
    assert jnp.allclose(out, ref, atol=atol, rtol=rtol), (
        f"{name}: mismatch vs JAX reference (max abs err {err})")


if __name__ == "__main__":
    key = jax.random.PRNGKey(0)
    n_layers = 3
    B, C, H, W = 2, 1, 16, 16

    kx, kw = jax.random.split(key)
    x = jax.random.normal(kx, (B, C, H, W), dtype=jnp.float32)

    # Deterministic Conv2d(1,1,3,3) weights: kaiming-uniform-like U(-1/3, 1/3)
    # (fan_in = 9), then InvertibleConv2d.init_weight sets w[..., -1, -1] = 1.
    bound = 1.0 / 3.0
    weights = jax.random.uniform(kw, (n_layers, 3, 3), jnp.float32, -bound, bound)
    weights = weights.at[:, 2, 2].set(1.0)

    ref = _ref_forward(x, weights)

    # Default (MXU composed-operator) path.
    out, logdet = model2_forward(x, weights)
    out = jax.block_until_ready(out)
    assert out.shape == (B, H * W)
    _check("matmul path", out, ref, atol=5e-4, rtol=5e-4)
    assert float(logdet) == 0.0

    # Roll/mask fallback path (regression test for large-image configs).
    out_roll, _ = model2_forward(x, weights, use_matmul=False)
    out_roll = jax.block_until_ready(out_roll)
    _check("roll path", out_roll, ref, atol=1e-4, rtol=1e-4)

    # Slightly larger batch exercising batch tiling + even grid count.
    B2 = 16
    x2 = jax.random.normal(jax.random.PRNGKey(1), (B2, C, H, W), dtype=jnp.float32)
    ref2 = _ref_forward(x2, weights)
    out2, _ = model2_forward(x2, weights)
    out2 = jax.block_until_ready(out2)
    _check("matmul path (B=16)", out2, ref2, atol=5e-4, rtol=5e-4)

    print("KERNEL_OK")
</pallas_src>

<mosaic_0001>
module attributes {stable_mosaic.version = 11 : i64} {
  func.func @_stack_matmul_kernel(%arg0: i32, %arg1: memref<256x256xf32, #tpu.memory_space<vmem>>, %arg2: memref<2x256xf32, #tpu.memory_space<vmem>>, %arg3: memref<2x256xf32, #tpu.memory_space<vmem>>) attributes {dimension_semantics = [#tpu.dimension_semantics<parallel>], iteration_bounds = array<i64: 1>, scalar_prefetch = 0 : i64, scratch_operands = 0 : i64, tpu.core_type = #tpu.core_type<tc>, window_params = [{pipeline_mode = #tpu.pipeline_mode<synchronous>, transform_indices = @transform_0, window_bounds = array<i64: 256, 256>}, {transform_indices = @transform_1, window_bounds = array<i64: 2, 256>}, {transform_indices = @transform_2, window_bounds = array<i64: 2, 256>}]} {
    %c0 = arith.constant 0 : index
    %c0_0 = arith.constant 0 : index
    %0 = vector.load %arg2[%c0, %c0_0] : memref<2x256xf32, #tpu.memory_space<vmem>>, vector<2x256xf32>
    %c0_1 = arith.constant 0 : index
    %c0_2 = arith.constant 0 : index
    %1 = vector.load %arg1[%c0_1, %c0_2] : memref<256x256xf32, #tpu.memory_space<vmem>>, vector<256x256xf32>
    %cst = arith.constant dense<0.000000e+00> : vector<2x256xf32>
    %2 = tpu.matmul %0, %1, %cst {dimension_numbers = #tpu.dot_dimension_numbers<[1], [0], [0], [1], [0, 0, 1, 1], [], []>, precision = #tpu.contract_precision<fp32>} : vector<2x256xf32>, vector<256x256xf32>, vector<2x256xf32> -> vector<2x256xf32>
    %c0_3 = arith.constant 0 : index
    %c0_4 = arith.constant 0 : index
    %3 = vector.load %arg3[%c0_3, %c0_4] : memref<2x256xf32, #tpu.memory_space<vmem>>, vector<2x256xf32>
    tpu.vector_store %arg3[%c0_3, %c0_4], %2 {strides = array<i32>} : memref<2x256xf32, #tpu.memory_space<vmem>>, vector<2x256xf32>,
    return
  }
  func.func @transform_0(%arg0: i32) -> (i32, i32) {
    %c0_i32 = arith.constant 0 : i32
    %c0_i32_0 = arith.constant 0 : i32
    %c0_i32_1 = arith.constant 0 : i32
    return %c0_i32, %c0_i32_0 : i32, i32
  }
  func.func @transform_1(%arg0: i32) -> (i32, i32) {
    %c0_i32 = arith.constant 0 : i32
    %c0_i32_0 = arith.constant 0 : i32
    return %arg0, %c0_i32 : i32, i32
  }
  func.func @transform_2(%arg0: i32) -> (i32, i32) {
    %c0_i32 = arith.constant 0 : i32
    %c0_i32_0 = arith.constant 0 : i32
    return %arg0, %c0_i32 : i32, i32
  }
}

</mosaic_0001>

<llo_original>
// kernel: tpu_custom_call.1
$region0: #{tpu_custom_call.1}
  #allocation0 [shape = 'u32[]', space=smem, size = 0x4, offset = 0x4, fixed_abs, tag = 'smem constant byte address 0x4 - core index']
  #allocation1 [shape = 'u32[144,128]{1,0:T(1,128)}', space=vmem, size = 0x12000, scoped, tag = 'internal scratch']
  %s0 = inlined_call_operand.hbm [shape: f32[256,256], index: 0, kind: input, shape index: {}]
  %s1 = inlined_call_operand.hbm [shape: f32[2,256], index: 1, kind: input, shape index: {}]
  %s2 = inlined_call_operand.hbm [shape: f32[2,256], index: 2, kind: output, shape index: {}]
  %s3 = sld [smem:[#allocation0]]
  $region26: #{tpu_custom_call.1} parent=0
    _
  %s5 = ssub.s32 1, %s3
  %s6 = scalar_select 0, %s5, %s3
  $region1: #{tpu_custom_call.1} parent=0
    #allocation2 [shape = 'u8[262144]{0}', space=vmem, size = 0x40000, scoped, tag = 'input window, operand 0, single buffered']
    #allocation3 [shape = 's32[1]{0}', space=sflag, size = 0x4, scoped, tag = 'scoped memory for tpu_custom_call.1']
    #allocation4 [shape = 's32[1]{0}', space=sflag, size = 0x4, scoped, tag = 'scoped memory for tpu_custom_call.1']
    #allocation5 [shape = 'u8[2048]{0}', space=vmem, size = 0x800, scoped, tag = 'input window, operand 1, single buffered']
    #allocation6 [shape = 's32[1]{0}', space=sflag, size = 0x4, scoped, tag = 'scoped memory for tpu_custom_call.1']
    #allocation7 [shape = 'u8[2048]{0}', space=vmem, size = 0x800, scoped, tag = 'output window, operand 0, single buffered']
    %7 = vsyncpa [#allocation3], 0
    %8 = vsyncpa [#allocation6], 0
    %9 = vsyncpa [#allocation4], 0
    // Predicated region
    $region2: #{tpu_custom_call.1} parent=1 // pred_check
      _
    $region3: #{tpu_custom_call.1} parent=1 // pred_check_branch
      %11 = sbr.rel (0) target = $region5
    $region4: #{tpu_custom_call.1} parent=1 // pred_region
      %s13 = ssub.s32 8192, 8192
      %14 = vsyncadd [#allocation3], %s13
      %s15 = sshll.u32 [#allocation2], 4
      %s16 = int_to_ptr.vmem [resolvable:$true] %s15
      %21 = dma.hbm_to_vmem [thread:$0]  %s0, 8192, %s16, [#allocation3], 256, 256, 16
    $region5: #{tpu_custom_call.1} parent=1 // pred_fallthru
      _
    // Predicated region
    $region6: #{tpu_custom_call.1} parent=1 // pred_check
      _
    $region7: #{tpu_custom_call.1} parent=1 // pred_check_branch
      %23 = sbr.rel (0) target = $region9
    $region8: #{tpu_custom_call.1} parent=1 // pred_region
      %s25 = ssub.s32 64, 64
      %26 = vsyncadd [#allocation6], %s25
      %s28 = sshll.u32 [#allocation5], 4
      %s29 = int_to_ptr.vmem [resolvable:$true] %s28
      %31 = dma.hbm_to_vmem [thread:$0]  %s1, 64, %s29, [#allocation6]
    $region9: #{tpu_custom_call.1} parent=1 // pred_fallthru
      _
    // Predicated region
    $region10: #{tpu_custom_call.1} parent=1 // pred_check
      _
    $region11: #{tpu_custom_call.1} parent=1 // pred_check_branch
      %33 = sbr.rel (0) target = $region13
    $region12: #{tpu_custom_call.1} parent=1 // pred_region
      %34 = dma.done [#allocation3], 8192
    $region13: #{tpu_custom_call.1} parent=1 // pred_fallthru
      _
    // Predicated region
    $region14: #{tpu_custom_call.1} parent=1 // pred_check
      _
    $region15: #{tpu_custom_call.1} parent=1 // pred_check_branch
      %36 = sbr.rel (0) target = $region17
    $region16: #{tpu_custom_call.1} parent=1 // pred_region
      %37 = dma.done [#allocation6], 64
    $region17: #{tpu_custom_call.1} parent=1 // pred_fallthru
      _
    %v38 = vld [vmem:[#allocation5] sm:$0xf]
    %v39 = vld [vmem:[#allocation2] sm:$0xff]
    %v40 = vld [vmem:[#allocation2 + $0x8] sm:$0xff]
    %v41 = vld [vmem:[#allocation2 + $0x10] sm:$0xff]
    %v42 = vld [vmem:[#allocation2 + $0x18] sm:$0xff]
    %v43 = vld [vmem:[#allocation2 + $0x20] sm:$0xff]
    %v44 = vld [vmem:[#allocation2 + $0x28] sm:$0xff]
    %v45 = vld [vmem:[#allocation2 + $0x30] sm:$0xff]
    %v46 = vld [vmem:[#allocation2 + $0x38] sm:$0xff]
    %v47 = vld [vmem:[#allocation2 + $0x40] sm:$0xff]
    %v48 = vld [vmem:[#allocation2 + $0x48] sm:$0xff]
    %v49 = vld [vmem:[#allocation2 + $0x50] sm:$0xff]
    %v50 = vld [vmem:[#allocation2 + $0x58] sm:$0xff]
    %v51 = vld [vmem:[#allocation2 + $0x60] sm:$0xff]
    %v52 = vld [vmem:[#allocation2 + $0x68] sm:$0xff]
    %v53 = vld [vmem:[#allocation2 + $0x70] sm:$0xff]
    %v54 = vld [vmem:[#allocation2 + $0x78] sm:$0xff]
    %v55 = vld [vmem:[#allocation2 + $0x80] sm:$0xff]
    %v56 = vld [vmem:[#allocation2 + $0x88] sm:$0xff]
    %v57 = vld [vmem:[#allocation2 + $0x90] sm:$0xff]
    %v58 = vld [vmem:[#allocation2 + $0x98] sm:$0xff]
    %v59 = vld [vmem:[#allocation2 + $0xa0] sm:$0xff]
    %v60 = vld [vmem:[#allocation2 + $0xa8] sm:$0xff]
    %v61 = vld [vmem:[#allocation2 + $0xb0] sm:$0xff]
    %v62 = vld [vmem:[#allocation2 + $0xb8] sm:$0xff]
    %v63 = vld [vmem:[#allocation2 + $0xc0] sm:$0xff]
    %v64 = vld [vmem:[#allocation2 + $0xc8] sm:$0xff]
    %v65 = vld [vmem:[#allocation2 + $0xd0] sm:$0xff]
    %v66 = vld [vmem:[#allocation2 + $0xd8] sm:$0xff]
    %v67 = vld [vmem:[#allocation2 + $0xe0] sm:$0xff]
    %v68 = vld [vmem:[#allocation2 + $0xe8] sm:$0xff]
    %v69 = vld [vmem:[#allocation2 + $0xf0] sm:$0xff]
    %v70 = vld [vmem:[#allocation2 + $0xf8] sm:$0xff]
    %v71 = vld [vmem:[#allocation2 + $0x100] sm:$0xff]
    %v72 = vld [vmem:[#allocation2 + $0x108] sm:$0xff]
    %v73 = vld [vmem:[#allocation2 + $0x110] sm:$0xff]
    %v74 = vld [vmem:[#allocation2 + $0x118] sm:$0xff]
    %v75 = vld [vmem:[#allocation2 + $0x120] sm:$0xff]
    %v76 = vld [vmem:[#allocation2 + $0x128] sm:$0xff]
    %v77 = vld [vmem:[#allocation2 + $0x130] sm:$0xff]
    %v78 = vld [vmem:[#allocation2 + $0x138] sm:$0xff]
    %v79 = vld [vmem:[#allocation2 + $0x140] sm:$0xff]
    %v80 = vld [vmem:[#allocation2 + $0x148] sm:$0xff]
    %v81 = vld [vmem:[#allocation2 + $0x150] sm:$0xff]
    %v82 = vld [vmem:[#allocation2 + $0x158] sm:$0xff]
    %v83 = vld [vmem:[#allocation2 + $0x160] sm:$0xff]
    %v84 = vld [vmem:[#allocation2 + $0x168] sm:$0xff]
    %v85 = vld [vmem:[#allocation2 + $0x170] sm:$0xff]
    %v86 = vld [vmem:[#allocation2 + $0x178] sm:$0xff]
    %v87 = vld [vmem:[#allocation2 + $0x180] sm:$0xff]
    %v88 = vld [vmem:[#allocation2 + $0x188] sm:$0xff]
    %v89 = vld [vmem:[#allocation2 + $0x190] sm:$0xff]
    %v90 = vld [vmem:[#allocation2 + $0x198] sm:$0xff]
    %v91 = vld [vmem:[#allocation2 + $0x1a0] sm:$0xff]
    %v92 = vld [vmem:[#allocation2 + $0x1a8] sm:$0xff]
    %v93 = vld [vmem:[#allocation2 + $0x1b0] sm:$0xff]
    %v94 = vld [vmem:[#allocation2 + $0x1b8] sm:$0xff]
    %v95 = vld [vmem:[#allocation2 + $0x1c0] sm:$0xff]
    %v96 = vld [vmem:[#allocation2 + $0x1c8] sm:$0xff]
    %v97 = vld [vmem:[#allocation2 + $0x1d0] sm:$0xff]
    %v98 = vld [vmem:[#allocation2 + $0x1d8] sm:$0xff]
    %v99 = vld [vmem:[#allocation2 + $0x1e0] sm:$0xff]
    %v100 = vld [vmem:[#allocation2 + $0x1e8] sm:$0xff]
    %v101 = vld [vmem:[#allocation2 + $0x1f0] sm:$0xff]
    %v102 = vld [vmem:[#allocation2 + $0x1f8] sm:$0xff]
    %v105 = vunpack.c.l.s4 1983009808
    %v106 = vunpack.c.0.s8 %v105
    %v107 = vlaneseq
    %v108 = vshrl.u32 %v107, 7
    %v109 = vsub.s32 %v106, %v108
    %v110 = vrot.slane %v38, %v109
    %v111 = vcombine.high %v110, %v110
    %v114 = vand.u32 %v70, 4294901760
    %115 = vmatprep.subr.mxu0 %v114
    %v116 = vand.u32 %v69, 4294901760
    %117 = vmatpush1.msra.mxu0 %v116
    %v118 = vand.u32 %v68, 4294901760
    %119 = vmatprep.subr.mxu0 %v118
    %v120 = vand.u32 %v67, 4294901760
    %121 = vmatpush1.msra.mxu0 %v120
    %v122 = vand.u32 %v66, 4294901760
    %123 = vmatprep.subr.mxu0 %v122
    %v124 = vand.u32 %v65, 4294901760
    %125 = vmatpush1.msra.mxu0 %v124
    %v126 = vand.u32 %v64, 4294901760
    %127 = vmatprep.subr.mxu0 %v126
    %v128 = vand.u32 %v63, 4294901760
    %129 = vmatpush1.msra.mxu0 %v128
    %v130 = vand.u32 %v62, 4294901760
    %131 = vmatprep.subr.mxu0 %v130
    %v132 = vand.u32 %v61, 4294901760
    %133 = vmatpush1.msra.mxu0 %v132
    %v134 = vand.u32 %v60, 4294901760
    %135 = vmatprep.subr.mxu0 %v134
    %v136 = vand.u32 %v59, 4294901760
    %137 = vmatpush1.msra.mxu0 %v136
    %v138 = vand.u32 %v58, 4294901760
    %139 = vmatprep.subr.mxu0 %v138
    %v140 = vand.u32 %v57, 4294901760
    %141 = vmatpush1.msra.mxu0 %v140
    %v142 = vand.u32 %v56, 4294901760
    %143 = vmatprep.subr.mxu0 %v142
    %v144 = vand.u32 %v55, 4294901760
    %145 = vmatpush1.msra.mxu0 %v144
    %v146 = vand.u32 %v54, 4294901760
    %147 = vmatprep.subr.mxu0 %v146
    %v148 = vand.u32 %v53, 4294901760
    %149 = vmatpush1.msra.mxu0 %v148
    %v150 = vand.u32 %v52, 4294901760
    %151 = vmatprep.subr.mxu0 %v150
    %v152 = vand.u32 %v51, 4294901760
    %153 = vmatpush1.msra.mxu0 %v152
    %v154 = vand.u32 %v50, 4294901760
    %155 = vmatprep.subr.mxu0 %v154
    %v156 = vand.u32 %v49, 4294901760
    %157 = vmatpush1.msra.mxu0 %v156
    %v158 = vand.u32 %v48, 4294901760
    %159 = vmatprep.subr.mxu0 %v158
    %v160 = vand.u32 %v47, 4294901760
    %161 = vmatpush1.msra.mxu0 %v160
    %v162 = vand.u32 %v46, 4294901760
    %163 = vmatprep.subr.mxu0 %v162
    %v164 = vand.u32 %v45, 4294901760
    %165 = vmatpush1.msra.mxu0 %v164
    %v166 = vand.u32 %v44, 4294901760
    %167 = vmatprep.subr.mxu0 %v166
    %v168 = vand.u32 %v43, 4294901760
    %169 = vmatpush1.msra.mxu0 %v168
    %v170 = vand.u32 %v42, 4294901760
    %171 = vmatprep.subr.mxu0 %v170
    %v172 = vand.u32 %v41, 4294901760
    %173 = vmatpush1.msra.mxu0 %v172
    %v174 = vand.u32 %v40, 4294901760
    %175 = vmatprep.subr.mxu0 %v174
    %v176 = vand.u32 %v39, 4294901760
    %177 = vmatpush1.msra.mxu0 %v176
    %v178 = vand.u32 %v102, 4294901760
    %179 = vmatprep.subr.mxu0 %v178
    %v180 = vand.u32 %v101, 4294901760
    %181 = vmatpush2.msra.mxu0 %v180
    %v182 = vand.u32 %v100, 4294901760
    %183 = vmatprep.subr.mxu0 %v182
    %v184 = vand.u32 %v99, 4294901760
    %185 = vmatpush2.msra.mxu0 %v184
    %v186 = vand.u32 %v98, 4294901760
    %187 = vmatprep.subr.mxu0 %v186
    %v188 = vand.u32 %v97, 4294901760
    %189 = vmatpush2.msra.mxu0 %v188
    %v190 = vand.u32 %v96, 4294901760
    %191 = vmatprep.subr.mxu0 %v190
    %v192 = vand.u32 %v95, 4294901760
    %193 = vmatpush2.msra.mxu0 %v192
    %v194 = vand.u32 %v94, 4294901760
    %195 = vmatprep.subr.mxu0 %v194
    %v196 = vand.u32 %v93, 4294901760
    %197 = vmatpush2.msra.mxu0 %v196
    %v198 = vand.u32 %v92, 4294901760
    %199 = vmatprep.subr.mxu0 %v198
    %v200 = vand.u32 %v91, 4294901760
    %201 = vmatpush2.msra.mxu0 %v200
    %v202 = vand.u32 %v90, 4294901760
    %203 = vmatprep.subr.mxu0 %v202
    %v204 = vand.u32 %v89, 4294901760
    %205 = vmatpush2.msra.mxu0 %v204
    %v206 = vand.u32 %v88, 4294901760
    %207 = vmatprep.subr.mxu0 %v206
    %v208 = vand.u32 %v87, 4294901760
    %209 = vmatpush2.msra.mxu0 %v208
    %v210 = vand.u32 %v86, 4294901760
    %211 = vmatprep.subr.mxu0 %v210
    %v212 = vand.u32 %v85, 4294901760
    %213 = vmatpush2.msra.mxu0 %v212
    %v214 = vand.u32 %v84, 4294901760
    %215 = vmatprep.subr.mxu0 %v214
    %v216 = vand.u32 %v83, 4294901760
    %217 = vmatpush2.msra.mxu0 %v216
    %v218 = vand.u32 %v82, 4294901760
    %219 = vmatprep.subr.mxu0 %v218
    %v220 = vand.u32 %v81, 4294901760
    %221 = vmatpush2.msra.mxu0 %v220
    %v222 = vand.u32 %v80, 4294901760
    %223 = vmatprep.subr.mxu0 %v222
    %v224 = vand.u32 %v79, 4294901760
    %225 = vmatpush2.msra.mxu0 %v224
    %v226 = vand.u32 %v78, 4294901760
    %227 = vmatprep.subr.mxu0 %v226
    %v228 = vand.u32 %v77, 4294901760
    %229 = vmatpush2.msra.mxu0 %v228
    %v230 = vand.u32 %v76, 4294901760
    %231 = vmatprep.subr.mxu0 %v230
    %v232 = vand.u32 %v75, 4294901760
    %233 = vmatpush2.msra.mxu0 %v232
    %v234 = vand.u32 %v74, 4294901760
    %235 = vmatprep.subr.mxu0 %v234
    %v236 = vand.u32 %v73, 4294901760
    %237 = vmatpush2.msra.mxu0 %v236
    %v238 = vand.u32 %v72, 4294901760
    %239 = vmatprep.subr.mxu0 %v238
    %v240 = vand.u32 %v71, 4294901760
    %241 = vmatpush2.msra.mxu0 %v240
    %v242 = vand.u32 %v111, 4294901760
    %v243 = vsub.f32 %v111, %v242
    %v244 = vand.u32 %v243, 4294901760
    %v245 = vsub.f32 %v243, %v244
    %v246 = vand.u32 %v245, 4294901760
    %247 = vmatprep.mubr.f32.mxu0 %v246
    %v248 = vand.u32 %v110, 4294901760
    %v249 = vsub.f32 %v110, %v248
    %v250 = vand.u32 %v249, 4294901760
    %v251 = vsub.f32 %v249, %v250
    %v252 = vand.u32 %v251, 4294901760
    %253 = vmatmul.mubr.f32.gmra.mxu0 %v252
    %v254 = vpop.f32.mrf.mxu0
    %v255 = vadd.f32 0.0, %v254
    %v256 = vpop.f32.mrf.mxu0
    %v257 = vadd.f32 0.0, %v256
    %258 = vdwg.mxu0
    %v259 = vand.u32 %v70, 4294901760
    %v260 = vsub.f32 %v70, %v259
    %v261 = vand.u32 %v260, 4294901760
    %v262 = vsub.f32 %v260, %v261
    %v263 = vand.u32 %v262, 4294901760
    %264 = vmatprep.subr.mxu0 %v263
    %v265 = vand.u32 %v69, 4294901760
    %v266 = vsub.f32 %v69, %v265
    %v267 = vand.u32 %v266, 4294901760
    %v268 = vsub.f32 %v266, %v267
    %v269 = vand.u32 %v268, 4294901760
    %270 = vmatpush1.msra.mxu0 %v269
    %v271 = vand.u32 %v68, 4294901760
    %v272 = vsub.f32 %v68, %v271
    %v273 = vand.u32 %v272, 4294901760
    %v274 = vsub.f32 %v272, %v273
    %v275 = vand.u32 %v274, 4294901760
    %276 = vmatprep.subr.mxu0 %v275
    %v277 = vand.u32 %v67, 4294901760
    %v278 = vsub.f32 %v67, %v277
    %v279 = vand.u32 %v278, 4294901760
    %v280 = vsub.f32 %v278, %v279
    %v281 = vand.u32 %v280, 4294901760
    %282 = vmatpush1.msra.mxu0 %v281
    %v283 = vand.u32 %v66, 4294901760
    %v284 = vsub.f32 %v66, %v283
    %v285 = vand.u32 %v284, 4294901760
    %v286 = vsub.f32 %v284, %v285
    %v287 = vand.u32 %v286, 4294901760
    %288 = vmatprep.subr.mxu0 %v287
    %v289 = vand.u32 %v65, 4294901760
    %v290 = vsub.f32 %v65, %v289
    %v291 = vand.u32 %v290, 4294901760
    %v292 = vsub.f32 %v290, %v291
    %v293 = vand.u32 %v292, 4294901760
    %294 = vmatpush1.msra.mxu0 %v293
    %v295 = vand.u32 %v64, 4294901760
    %v296 = vsub.f32 %v64, %v295
    %v297 = vand.u32 %v296, 4294901760
    %v298 = vsub.f32 %v296, %v297
    %v299 = vand.u32 %v298, 4294901760
    %300 = vmatprep.subr.mxu0 %v299
    %v301 = vand.u32 %v63, 4294901760
    %v302 = vsub.f32 %v63, %v301
    %v303 = vand.u32 %v302, 4294901760
    %v304 = vsub.f32 %v302, %v303
    %v305 = vand.u32 %v304, 4294901760
    %306 = vmatpush1.msra.mxu0 %v305
    %v307 = vand.u32 %v62, 4294901760
    %v308 = vsub.f32 %v62, %v307
    %v309 = vand.u32 %v308, 4294901760
    %v310 = vsub.f32 %v308, %v309
    %v311 = vand.u32 %v310, 4294901760
    %312 = vmatprep.subr.mxu0 %v311
    %v313 = vand.u32 %v61, 4294901760
    %v314 = vsub.f32 %v61, %v313
    %v315 = vand.u32 %v314, 4294901760
    %v316 = vsub.f32 %v314, %v315
    %v317 = vand.u32 %v316, 4294901760
    %318 = vmatpush1.msra.mxu0 %v317
    %v319 = vand.u32 %v60, 4294901760
    %v320 = vsub.f32 %v60, %v319
    %v321 = vand.u32 %v320, 4294901760
    %v322 = vsub.f32 %v320, %v321
    %v323 = vand.u32 %v322, 4294901760
    %324 = vmatprep.subr.mxu0 %v323
    %v325 = vand.u32 %v59, 4294901760
    %v326 = vsub.f32 %v59, %v325
    %v327 = vand.u32 %v326, 4294901760
    %v328 = vsub.f32 %v326, %v327
    %v329 = vand.u32 %v328, 4294901760
    %330 = vmatpush1.msra.mxu0 %v329
    %v331 = vand.u32 %v58, 4294901760
    %v332 = vsub.f32 %v58, %v331
    %v333 = vand.u32 %v332, 4294901760
    %v334 = vsub.f32 %v332, %v333
    %v335 = vand.u32 %v334, 4294901760
    %336 = vmatprep.subr.mxu0 %v335
    %v337 = vand.u32 %v57, 4294901760
    %v338 = vsub.f32 %v57, %v337
    %v339 = vand.u32 %v338, 4294901760
    %v340 = vsub.f32 %v338, %v339
    %v341 = vand.u32 %v340, 4294901760
    %342 = vmatpush1.msra.mxu0 %v341
    %v343 = vand.u32 %v56, 4294901760
    %v344 = vsub.f32 %v56, %v343
    %v345 = vand.u32 %v344, 4294901760
    %v346 = vsub.f32 %v344, %v345
    %v347 = vand.u32 %v346, 4294901760
    %348 = vmatprep.subr.mxu0 %v347
    %v349 = vand.u32 %v55, 4294901760
    %v350 = vsub.f32 %v55, %v349
    %v351 = vand.u32 %v350, 4294901760
    %v352 = vsub.f32 %v350, %v351
    %v353 = vand.u32 %v352, 4294901760
    %354 = vmatpush1.msra.mxu0 %v353
    %v355 = vand.u32 %v54, 4294901760
    %v356 = vsub.f32 %v54, %v355
    %v357 = vand.u32 %v356, 4294901760
    %v358 = vsub.f32 %v356, %v357
    %v359 = vand.u32 %v358, 4294901760
    %360 = vmatprep.subr.mxu0 %v359
    %v361 = vand.u32 %v53, 4294901760
    %v362 = vsub.f32 %v53, %v361
    %v363 = vand.u32 %v362, 4294901760
    %v364 = vsub.f32 %v362, %v363
    %v365 = vand.u32 %v364, 4294901760
    %366 = vmatpush1.msra.mxu0 %v365
    %v367 = vand.u32 %v52, 4294901760
    %v368 = vsub.f32 %v52, %v367
    %v369 = vand.u32 %v368, 4294901760
    %v370 = vsub.f32 %v368, %v369
    %v371 = vand.u32 %v370, 4294901760
    %372 = vmatprep.subr.mxu0 %v371
    %v373 = vand.u32 %v51, 4294901760
    %v374 = vsub.f32 %v51, %v373
    %v375 = vand.u32 %v374, 4294901760
    %v376 = vsub.f32 %v374, %v375
    %v377 = vand.u32 %v376, 4294901760
    %378 = vmatpush1.msra.mxu0 %v377
    %v379 = vand.u32 %v50, 4294901760
    %v380 = vsub.f32 %v50, %v379
    %v381 = vand.u32 %v380, 4294901760
    %v382 = vsub.f32 %v380, %v381
    %v383 = vand.u32 %v382, 4294901760
    %384 = vmatprep.subr.mxu0 %v383
    %v385 = vand.u32 %v49, 4294901760
    %v386 = vsub.f32 %v49, %v385
    %v387 = vand.u32 %v386, 4294901760
    %v388 = vsub.f32 %v386, %v387
    %v389 = vand.u32 %v388, 4294901760
    %390 = vmatpush1.msra.mxu0 %v389
    %v391 = vand.u32 %v48, 4294901760
    %v392 = vsub.f32 %v48, %v391
    %v393 = vand.u32 %v392, 4294901760
    %v394 = vsub.f32 %v392, %v393
    %v395 = vand.u32 %v394, 4294901760
    %396 = vmatprep.subr.mxu0 %v395
    %v397 = vand.u32 %v47, 4294901760
    %v398 = vsub.f32 %v47, %v397
    %v399 = vand.u32 %v398, 4294901760
    %v400 = vsub.f32 %v398, %v399
    %v401 = vand.u32 %v400, 4294901760
    %402 = vmatpush1.msra.mxu0 %v401
    %v403 = vand.u32 %v46, 4294901760
    %v404 = vsub.f32 %v46, %v403
    %v405 = vand.u32 %v404, 4294901760
    %v406 = vsub.f32 %v404, %v405
    %v407 = vand.u32 %v406, 4294901760
    %408 = vmatprep.subr.mxu0 %v407
    %v409 = vand.u32 %v45, 4294901760
    %v410 = vsub.f32 %v45, %v409
    %v411 = vand.u32 %v410, 4294901760
    %v412 = vsub.f32 %v410, %v411
    %v413 = vand.u32 %v412, 4294901760
    %414 = vmatpush1.msra.mxu0 %v413
    %v415 = vand.u32 %v44, 4294901760
    %v416 = vsub.f32 %v44, %v415
    %v417 = vand.u32 %v416, 4294901760
    %v418 = vsub.f32 %v416, %v417
    %v419 = vand.u32 %v418, 4294901760
    %420 = vmatprep.subr.mxu0 %v419
    %v421 = vand.u32 %v43, 4294901760
    %v422 = vsub.f32 %v43, %v421
    %v423 = vand.u32 %v422, 4294901760
    %v424 = vsub.f32 %v422, %v423
    %v425 = vand.u32 %v424, 4294901760
    %426 = vmatpush1.msra.mxu0 %v425
    %v427 = vand.u32 %v42, 4294901760
    %v428 = vsub.f32 %v42, %v427
    %v429 = vand.u32 %v428, 4294901760
    %v430 = vsub.f32 %v428, %v429
    %v431 = vand.u32 %v430, 4294901760
    %432 = vmatprep.subr.mxu0 %v431
    %v433 = vand.u32 %v41, 4294901760
    %v434 = vsub.f32 %v41, %v433
    %v435 = vand.u32 %v434, 4294901760
    %v436 = vsub.f32 %v434, %v435
    %v437 = vand.u32 %v436, 4294901760
    %438 = vmatpush1.msra.mxu0 %v437
    %v439 = vand.u32 %v40, 4294901760
    %v440 = vsub.f32 %v40, %v439
    %v441 = vand.u32 %v440, 4294901760
    %v442 = vsub.f32 %v440, %v441
    %v443 = vand.u32 %v442, 4294901760
    %444 = vmatprep.subr.mxu0 %v443
    %v445 = vand.u32 %v39, 4294901760
    %v446 = vsub.f32 %v39, %v445
    %v447 = vand.u32 %v446, 4294901760
    %v448 = vsub.f32 %v446, %v447
    %v449 = vand.u32 %v448, 4294901760
    %450 = vmatpush1.msra.mxu0 %v449
    %v451 = vand.u32 %v102, 4294901760
    %v452 = vsub.f32 %v102, %v451
    %v453 = vand.u32 %v452, 4294901760
    %v454 = vsub.f32 %v452, %v453
    %v455 = vand.u32 %v454, 4294901760
    %456 = vmatprep.subr.mxu0 %v455
    %v457 = vand.u32 %v101, 4294901760
    %v458 = vsub.f32 %v101, %v457
    %v459 = vand.u32 %v458, 4294901760
    %v460 = vsub.f32 %v458, %v459
    %v461 = vand.u32 %v460, 4294901760
    %462 = vmatpush2.msra.mxu0 %v461
    %v463 = vand.u32 %v100, 4294901760
    %v464 = vsub.f32 %v100, %v463
    %v465 = vand.u32 %v464, 4294901760
    %v466 = vsub.f32 %v464, %v465
    %v467 = vand.u32 %v466, 4294901760
    %468 = vmatprep.subr.mxu0 %v467
    %v469 = vand.u32 %v99, 4294901760
    %v470 = vsub.f32 %v99, %v469
    %v471 = vand.u32 %v470, 4294901760
    %v472 = vsub.f32 %v470, %v471
    %v473 = vand.u32 %v472, 4294901760
    %474 = vmatpush2.msra.mxu0 %v473
    %v475 = vand.u32 %v98, 4294901760
    %v476 = vsub.f32 %v98, %v475
    %v477 = vand.u32 %v476, 4294901760
    %v478 = vsub.f32 %v476, %v477
    %v479 = vand.u32 %v478, 4294901760
    %480 = vmatprep.subr.mxu0 %v479
    %v481 = vand.u32 %v97, 4294901760
    %v482 = vsub.f32 %v97, %v481
    %v483 = vand.u32 %v482, 4294901760
    %v484 = vsub.f32 %v482, %v483
    %v485 = vand.u32 %v484, 4294901760
    %486 = vmatpush2.msra.mxu0 %v485
    %v487 = vand.u32 %v96, 4294901760
    %v488 = vsub.f32 %v96, %v487
    %v489 = vand.u32 %v488, 4294901760
    %v490 = vsub.f32 %v488, %v489
    %v491 = vand.u32 %v490, 4294901760
    %492 = vmatprep.subr.mxu0 %v491
    %v493 = vand.u32 %v95, 4294901760
    %v494 = vsub.f32 %v95, %v493
    %v495 = vand.u32 %v494, 4294901760
    %v496 = vsub.f32 %v494, %v495
    %v497 = vand.u32 %v496, 4294901760
    %498 = vmatpush2.msra.mxu0 %v497
    %v499 = vand.u32 %v94, 4294901760
    %v500 = vsub.f32 %v94, %v499
    %v501 = vand.u32 %v500, 4294901760
    %v502 = vsub.f32 %v500, %v501
    %v503 = vand.u32 %v502, 4294901760
    %504 = vmatprep.subr.mxu0 %v503
    %v505 = vand.u32 %v93, 4294901760
    %v506 = vsub.f32 %v93, %v505
    %v507 = vand.u32 %v506, 4294901760
    %v508 = vsub.f32 %v506, %v507
    %v509 = vand.u32 %v508, 4294901760
    %510 = vmatpush2.msra.mxu0 %v509
    %v511 = vand.u32 %v92, 4294901760
    %v512 = vsub.f32 %v92, %v511
    %v513 = vand.u32 %v512, 4294901760
    %v514 = vsub.f32 %v512, %v513
    %v515 = vand.u32 %v514, 4294901760
    %516 = vmatprep.subr.mxu0 %v515
    %v517 = vand.u32 %v91, 4294901760
    %v518 = vsub.f32 %v91, %v517
    %v519 = vand.u32 %v518, 4294901760
    %v520 = vsub.f32 %v518, %v519
    %v521 = vand.u32 %v520, 4294901760
    %522 = vmatpush2.msra.mxu0 %v521
    %v523 = vand.u32 %v90, 4294901760
    %v524 = vsub.f32 %v90, %v523
    %v525 = vand.u32 %v524, 4294901760
    %v526 = vsub.f32 %v524, %v525
    %v527 = vand.u32 %v526, 4294901760
    %528 = vmatprep.subr.mxu0 %v527
    %v529 = vand.u32 %v89, 4294901760
    %v530 = vsub.f32 %v89, %v529
    %v531 = vand.u32 %v530, 4294901760
    %v532 = vsub.f32 %v530, %v531
    %v533 = vand.u32 %v532, 4294901760
    %534 = vmatpush2.msra.mxu0 %v533
    %v535 = vand.u32 %v88, 4294901760
    %v536 = vsub.f32 %v88, %v535
    %v537 = vand.u32 %v536, 4294901760
    %v538 = vsub.f32 %v536, %v537
    %v539 = vand.u32 %v538, 4294901760
    %540 = vmatprep.subr.mxu0 %v539
    %v541 = vand.u32 %v87, 4294901760
    %v542 = vsub.f32 %v87, %v541
    %v543 = vand.u32 %v542, 4294901760
    %v544 = vsub.f32 %v542, %v543
    %v545 = vand.u32 %v544, 4294901760
    %546 = vmatpush2.msra.mxu0 %v545
    %v547 = vand.u32 %v86, 4294901760
    %v548 = vsub.f32 %v86, %v547
    %v549 = vand.u32 %v548, 4294901760
    %v550 = vsub.f32 %v548, %v549
    %v551 = vand.u32 %v550, 4294901760
    %552 = vmatprep.subr.mxu0 %v551
    %v553 = vand.u32 %v85, 4294901760
    %v554 = vsub.f32 %v85, %v553
    %v555 = vand.u32 %v554, 4294901760
    %v556 = vsub.f32 %v554, %v555
    %v557 = vand.u32 %v556, 4294901760
    %558 = vmatpush2.msra.mxu0 %v557
    %v559 = vand.u32 %v84, 4294901760
    %v560 = vsub.f32 %v84, %v559
    %v561 = vand.u32 %v560, 4294901760
    %v562 = vsub.f32 %v560, %v561
    %v563 = vand.u32 %v562, 4294901760
    %564 = vmatprep.subr.mxu0 %v563
    %v565 = vand.u32 %v83, 4294901760
    %v566 = vsub.f32 %v83, %v565
    %v567 = vand.u32 %v566, 4294901760
    %v568 = vsub.f32 %v566, %v567
    %v569 = vand.u32 %v568, 4294901760
    %570 = vmatpush2.msra.mxu0 %v569
    %v571 = vand.u32 %v82, 4294901760
    %v572 = vsub.f32 %v82, %v571
    %v573 = vand.u32 %v572, 4294901760
    %v574 = vsub.f32 %v572, %v573
    %v575 = vand.u32 %v574, 4294901760
    %576 = vmatprep.subr.mxu0 %v575
    %v577 = vand.u32 %v81, 4294901760
    %v578 = vsub.f32 %v81, %v577
    %v579 = vand.u32 %v578, 4294901760
    %v580 = vsub.f32 %v578, %v579
    %v581 = vand.u32 %v580, 4294901760
    %582 = vmatpush2.msra.mxu0 %v581
    %v583 = vand.u32 %v80, 4294901760
    %v584 = vsub.f32 %v80, %v583
    %v585 = vand.u32 %v584, 4294901760
    %v586 = vsub.f32 %v584, %v585
    %v587 = vand.u32 %v586, 4294901760
    %588 = vmatprep.subr.mxu0 %v587
    %v589 = vand.u32 %v79, 4294901760
    %v590 = vsub.f32 %v79, %v589
    %v591 = vand.u32 %v590, 4294901760
    %v592 = vsub.f32 %v590, %v591
    %v593 = vand.u32 %v592, 4294901760
    %594 = vmatpush2.msra.mxu0 %v593
    %v595 = vand.u32 %v78, 4294901760
    %v596 = vsub.f32 %v78, %v595
    %v597 = vand.u32 %v596, 4294901760
    %v598 = vsub.f32 %v596, %v597
    %v599 = vand.u32 %v598, 4294901760
    %600 = vmatprep.subr.mxu0 %v599
    %v601 = vand.u32 %v77, 4294901760
    %v602 = vsub.f32 %v77, %v601
    %v603 = vand.u32 %v602, 4294901760
    %v604 = vsub.f32 %v602, %v603
    %v605 = vand.u32 %v604, 4294901760
    %606 = vmatpush2.msra.mxu0 %v605
    %v607 = vand.u32 %v76, 4294901760
    %v608 = vsub.f32 %v76, %v607
    %v609 = vand.u32 %v608, 4294901760
    %v610 = vsub.f32 %v608, %v609
    %v611 = vand.u32 %v610, 4294901760
    %612 = vmatprep.subr.mxu0 %v611
    %v613 = vand.u32 %v75, 4294901760
    %v614 = vsub.f32 %v75, %v613
    %v615 = vand.u32 %v614, 4294901760
    %v616 = vsub.f32 %v614, %v615
    %v617 = vand.u32 %v616, 4294901760
    %618 = vmatpush2.msra.mxu0 %v617
    %v619 = vand.u32 %v74, 4294901760
    %v620 = vsub.f32 %v74, %v619
    %v621 = vand.u32 %v620, 4294901760
    %v622 = vsub.f32 %v620, %v621
    %v623 = vand.u32 %v622, 4294901760
    %624 = vmatprep.subr.mxu0 %v623
    %v625 = vand.u32 %v73, 4294901760
    %v626 = vsub.f32 %v73, %v625
    %v627 = vand.u32 %v626, 4294901760
    %v628 = vsub.f32 %v626, %v627
    %v629 = vand.u32 %v628, 4294901760
    %630 = vmatpush2.msra.mxu0 %v629
    %v631 = vand.u32 %v72, 4294901760
    %v632 = vsub.f32 %v72, %v631
    %v633 = vand.u32 %v632, 4294901760
    %v634 = vsub.f32 %v632, %v633
    %v635 = vand.u32 %v634, 4294901760
    %636 = vmatprep.subr.mxu0 %v635
    %v637 = vand.u32 %v71, 4294901760
    %v638 = vsub.f32 %v71, %v637
    %v639 = vand.u32 %v638, 4294901760
    %v640 = vsub.f32 %v638, %v639
    %v641 = vand.u32 %v640, 4294901760
    %642 = vmatpush2.msra.mxu0 %v641
    %v643 = vand.u32 %v111, 4294901760
    %644 = vmatprep.mubr.f32.mxu0 %v643
    %v645 = vand.u32 %v110, 4294901760
    %646 = vmatmul.mubr.f32.gmra.mxu0 %v645
    %v647 = vpop.f32.mrf.mxu0
    %v648 = vadd.f32 %v255, %v647
    %v649 = vpop.f32.mrf.mxu0
    %v650 = vadd.f32 %v257, %v649
    %651 = vdwg.mxu0
    %v652 = vand.u32 %v70, 4294901760
    %v653 = vsub.f32 %v70, %v652
    %654 = vmatprep.subr.mxu0 %v653
    %v655 = vand.u32 %v69, 4294901760
    %v656 = vsub.f32 %v69, %v655
    %657 = vmatpush1.msra.mxu0 %v656
    %v658 = vand.u32 %v68, 4294901760
    %v659 = vsub.f32 %v68, %v658
    %660 = vmatprep.subr.mxu0 %v659
    %v661 = vand.u32 %v67, 4294901760
    %v662 = vsub.f32 %v67, %v661
    %663 = vmatpush1.msra.mxu0 %v662
    %v664 = vand.u32 %v66, 4294901760
    %v665 = vsub.f32 %v66, %v664
    %666 = vmatprep.subr.mxu0 %v665
    %v667 = vand.u32 %v65, 4294901760
    %v668 = vsub.f32 %v65, %v667
    %669 = vmatpush1.msra.mxu0 %v668
    %v670 = vand.u32 %v64, 4294901760
    %v671 = vsub.f32 %v64, %v670
    %672 = vmatprep.subr.mxu0 %v671
    %v673 = vand.u32 %v63, 4294901760
    %v674 = vsub.f32 %v63, %v673
    %675 = vmatpush1.msra.mxu0 %v674
    %v676 = vand.u32 %v62, 4294901760
    %v677 = vsub.f32 %v62, %v676
    %678 = vmatprep.subr.mxu0 %v677
    %v679 = vand.u32 %v61, 4294901760
    %v680 = vsub.f32 %v61, %v679
    %681 = vmatpush1.msra.mxu0 %v680
    %v682 = vand.u32 %v60, 4294901760
    %v683 = vsub.f32 %v60, %v682
    %684 = vmatprep.subr.mxu0 %v683
    %v685 = vand.u32 %v59, 4294901760
    %v686 = vsub.f32 %v59, %v685
    %687 = vmatpush1.msra.mxu0 %v686
    %v688 = vand.u32 %v58, 4294901760
    %v689 = vsub.f32 %v58, %v688
    %690 = vmatprep.subr.mxu0 %v689
    %v691 = vand.u32 %v57, 4294901760
    %v692 = vsub.f32 %v57, %v691
    %693 = vmatpush1.msra.mxu0 %v692
    %v694 = vand.u32 %v56, 4294901760
    %v695 = vsub.f32 %v56, %v694
    %696 = vmatprep.subr.mxu0 %v695
    %v697 = vand.u32 %v55, 4294901760
    %v698 = vsub.f32 %v55, %v697
    %699 = vmatpush1.msra.mxu0 %v698
    %v700 = vand.u32 %v54, 4294901760
    %v701 = vsub.f32 %v54, %v700
    %702 = vmatprep.subr.mxu0 %v701
    %v703 = vand.u32 %v53, 4294901760
    %v704 = vsub.f32 %v53, %v703
    %705 = vmatpush1.msra.mxu0 %v704
    %v706 = vand.u32 %v52, 4294901760
    %v707 = vsub.f32 %v52, %v706
    %708 = vmatprep.subr.mxu0 %v707
    %v709 = vand.u32 %v51, 4294901760
    %v710 = vsub.f32 %v51, %v709
    %711 = vmatpush1.msra.mxu0 %v710
    %v712 = vand.u32 %v50, 4294901760
    %v713 = vsub.f32 %v50, %v712
    %714 = vmatprep.subr.mxu0 %v713
    %v715 = vand.u32 %v49, 4294901760
    %v716 = vsub.f32 %v49, %v715
    %717 = vmatpush1.msra.mxu0 %v716
    %v718 = vand.u32 %v48, 4294901760
    %v719 = vsub.f32 %v48, %v718
    %720 = vmatprep.subr.mxu0 %v719
    %v721 = vand.u32 %v47, 4294901760
    %v722 = vsub.f32 %v47, %v721
    %723 = vmatpush1.msra.mxu0 %v722
    %v724 = vand.u32 %v46, 4294901760
    %v725 = vsub.f32 %v46, %v724
    %726 = vmatprep.subr.mxu0 %v725
    %v727 = vand.u32 %v45, 4294901760
    %v728 = vsub.f32 %v45, %v727
    %729 = vmatpush1.msra.mxu0 %v728
    %v730 = vand.u32 %v44, 4294901760
    %v731 = vsub.f32 %v44, %v730
    %732 = vmatprep.subr.mxu0 %v731
    %v733 = vand.u32 %v43, 4294901760
    %v734 = vsub.f32 %v43, %v733
    %735 = vmatpush1.msra.mxu0 %v734
    %v736 = vand.u32 %v42, 4294901760
    %v737 = vsub.f32 %v42, %v736
    %738 = vmatprep.subr.mxu0 %v737
    %v739 = vand.u32 %v41, 4294901760
    %v740 = vsub.f32 %v41, %v739
    %741 = vmatpush1.msra.mxu0 %v740
    %v742 = vand.u32 %v40, 4294901760
    %v743 = vsub.f32 %v40, %v742
    %744 = vmatprep.subr.mxu0 %v743
    %v745 = vand.u32 %v39, 4294901760
    %v746 = vsub.f32 %v39, %v745
    %747 = vmatpush1.msra.mxu0 %v746
    %v748 = vand.u32 %v102, 4294901760
    %v749 = vsub.f32 %v102, %v748
    %750 = vmatprep.subr.mxu0 %v749
    %v751 = vand.u32 %v101, 4294901760
    %v752 = vsub.f32 %v101, %v751
    %753 = vmatpush2.msra.mxu0 %v752
    %v754 = vand.u32 %v100, 4294901760
    %v755 = vsub.f32 %v100, %v754
    %756 = vmatprep.subr.mxu0 %v755
    %v757 = vand.u32 %v99, 4294901760
    %v758 = vsub.f32 %v99, %v757
    %759 = vmatpush2.msra.mxu0 %v758
    %v760 = vand.u32 %v98, 4294901760
    %v761 = vsub.f32 %v98, %v760
    %762 = vmatprep.subr.mxu0 %v761
    %v763 = vand.u32 %v97, 4294901760
    %v764 = vsub.f32 %v97, %v763
    %765 = vmatpush2.msra.mxu0 %v764
    %v766 = vand.u32 %v96, 4294901760
    %v767 = vsub.f32 %v96, %v766
    %768 = vmatprep.subr.mxu0 %v767
    %v769 = vand.u32 %v95, 4294901760
    %v770 = vsub.f32 %v95, %v769
    %771 = vmatpush2.msra.mxu0 %v770
    %v772 = vand.u32 %v94, 4294901760
    %v773 = vsub.f32 %v94, %v772
    %774 = vmatprep.subr.mxu0 %v773
    %v775 = vand.u32 %v93, 4294901760
    %v776 = vsub.f32 %v93, %v775
    %777 = vmatpush2.msra.mxu0 %v776
    %v778 = vand.u32 %v92, 4294901760
    %v779 = vsub.f32 %v92, %v778
    %780 = vmatprep.subr.mxu0 %v779
    %v781 = vand.u32 %v91, 4294901760
    %v782 = vsub.f32 %v91, %v781
    %783 = vmatpush2.msra.mxu0 %v782
    %v784 = vand.u32 %v90, 4294901760
    %v785 = vsub.f32 %v90, %v784
    %786 = vmatprep.subr.mxu0 %v785
    %v787 = vand.u32 %v89, 4294901760
    %v788 = vsub.f32 %v89, %v787
    %789 = vmatpush2.msra.mxu0 %v788
    %v790 = vand.u32 %v88, 4294901760
    %v791 = vsub.f32 %v88, %v790
    %792 = vmatprep.subr.mxu0 %v791
    %v793 = vand.u32 %v87, 4294901760
    %v794 = vsub.f32 %v87, %v793
    %795 = vmatpush2.msra.mxu0 %v794
    %v796 = vand.u32 %v86, 4294901760
    %v797 = vsub.f32 %v86, %v796
    %798 = vmatprep.subr.mxu0 %v797
    %v799 = vand.u32 %v85, 4294901760
    %v800 = vsub.f32 %v85, %v799
    %801 = vmatpush2.msra.mxu0 %v800
    %v802 = vand.u32 %v84, 4294901760
    %v803 = vsub.f32 %v84, %v802
    %804 = vmatprep.subr.mxu0 %v803
    %v805 = vand.u32 %v83, 4294901760
    %v806 = vsub.f32 %v83, %v805
    %807 = vmatpush2.msra.mxu0 %v806
    %v808 = vand.u32 %v82, 4294901760
    %v809 = vsub.f32 %v82, %v808
    %810 = vmatprep.subr.mxu0 %v809
    %v811 = vand.u32 %v81, 4294901760
    %v812 = vsub.f32 %v81, %v811
    %813 = vmatpush2.msra.mxu0 %v812
    %v814 = vand.u32 %v80, 4294901760
    %v815 = vsub.f32 %v80, %v814
    %816 = vmatprep.subr.mxu0 %v815
    %v817 = vand.u32 %v79, 4294901760
    %v818 = vsub.f32 %v79, %v817
    %819 = vmatpush2.msra.mxu0 %v818
    %v820 = vand.u32 %v78, 4294901760
    %v821 = vsub.f32 %v78, %v820
    %822 = vmatprep.subr.mxu0 %v821
    %v823 = vand.u32 %v77, 4294901760
    %v824 = vsub.f32 %v77, %v823
    %825 = vmatpush2.msra.mxu0 %v824
    %v826 = vand.u32 %v76, 4294901760
    %v827 = vsub.f32 %v76, %v826
    %828 = vmatprep.subr.mxu0 %v827
    %v829 = vand.u32 %v75, 4294901760
    %v830 = vsub.f32 %v75, %v829
    %831 = vmatpush2.msra.mxu0 %v830
    %v832 = vand.u32 %v74, 4294901760
    %v833 = vsub.f32 %v74, %v832
    %834 = vmatprep.subr.mxu0 %v833
    %v835 = vand.u32 %v73, 4294901760
    %v836 = vsub.f32 %v73, %v835
    %837 = vmatpush2.msra.mxu0 %v836
    %v838 = vand.u32 %v72, 4294901760
    %v839 = vsub.f32 %v72, %v838
    %840 = vmatprep.subr.mxu0 %v839
    %v841 = vand.u32 %v71, 4294901760
    %v842 = vsub.f32 %v71, %v841
    %843 = vmatpush2.msra.mxu0 %v842
    %v844 = vand.u32 %v111, 4294901760
    %v845 = vsub.f32 %v111, %v844
    %846 = vmatprep.mubr.f32.mxu0 %v845
    %v847 = vand.u32 %v110, 4294901760
    %v848 = vsub.f32 %v110, %v847
    %849 = vmatmul.mubr.f32.gmra.mxu0 %v848
    %v850 = vpop.f32.mrf.mxu0
    %v851 = vadd.f32 %v648, %v850
    %v852 = vpop.f32.mrf.mxu0
    %v853 = vadd.f32 %v650, %v852
    %854 = vdwg.mxu0
    %v855 = vand.u32 %v70, 4294901760
    %856 = vmatprep.subr.mxu0 %v855
    %v857 = vand.u32 %v69, 4294901760
    %858 = vmatpush1.msra.mxu0 %v857
    %v859 = vand.u32 %v68, 4294901760
    %860 = vmatprep.subr.mxu0 %v859
    %v861 = vand.u32 %v67, 4294901760
    %862 = vmatpush1.msra.mxu0 %v861
    %v863 = vand.u32 %v66, 4294901760
    %864 = vmatprep.subr.mxu0 %v863
    %v865 = vand.u32 %v65, 4294901760
    %866 = vmatpush1.msra.mxu0 %v865
    %v867 = vand.u32 %v64, 4294901760
    %868 = vmatprep.subr.mxu0 %v867
    %v869 = vand.u32 %v63, 4294901760
    %870 = vmatpush1.msra.mxu0 %v869
    %v871 = vand.u32 %v62, 4294901760
    %872 = vmatprep.subr.mxu0 %v871
    %v873 = vand.u32 %v61, 4294901760
    %874 = vmatpush1.msra.mxu0 %v873
    %v875 = vand.u32 %v60, 4294901760
    %876 = vmatprep.subr.mxu0 %v875
    %v877 = vand.u32 %v59, 4294901760
    %878 = vmatpush1.msra.mxu0 %v877
    %v879 = vand.u32 %v58, 4294901760
    %880 = vmatprep.subr.mxu0 %v879
    %v881 = vand.u32 %v57, 4294901760
    %882 = vmatpush1.msra.mxu0 %v881
    %v883 = vand.u32 %v56, 4294901760
    %884 = vmatprep.subr.mxu0 %v883
    %v885 = vand.u32 %v55, 4294901760
    %886 = vmatpush1.msra.mxu0 %v885
    %v887 = vand.u32 %v54, 4294901760
    %888 = vmatprep.subr.mxu0 %v887
    %v889 = vand.u32 %v53, 4294901760
    %890 = vmatpush1.msra.mxu0 %v889
    %v891 = vand.u32 %v52, 4294901760
    %892 = vmatprep.subr.mxu0 %v891
    %v893 = vand.u32 %v51, 4294901760
    %894 = vmatpush1.msra.mxu0 %v893
    %v895 = vand.u32 %v50, 4294901760
    %896 = vmatprep.subr.mxu0 %v895
    %v897 = vand.u32 %v49, 4294901760
    %898 = vmatpush1.msra.mxu0 %v897
    %v899 = vand.u32 %v48, 4294901760
    %900 = vmatprep.subr.mxu0 %v899
    %v901 = vand.u32 %v47, 4294901760
    %902 = vmatpush1.msra.mxu0 %v901
    %v903 = vand.u32 %v46, 4294901760
    %904 = vmatprep.subr.mxu0 %v903
    %v905 = vand.u32 %v45, 4294901760
    %906 = vmatpush1.msra.mxu0 %v905
    %v907 = vand.u32 %v44, 4294901760
    %908 = vmatprep.subr.mxu0 %v907
    %v909 = vand.u32 %v43, 4294901760
    %910 = vmatpush1.msra.mxu0 %v909
    %v911 = vand.u32 %v42, 4294901760
    %912 = vmatprep.subr.mxu0 %v911
    %v913 = vand.u32 %v41, 4294901760
    %914 = vmatpush1.msra.mxu0 %v913
    %v915 = vand.u32 %v40, 4294901760
    %916 = vmatprep.subr.mxu0 %v915
    %v917 = vand.u32 %v39, 4294901760
    %918 = vmatpush1.msra.mxu0 %v917
    %v919 = vand.u32 %v102, 4294901760
    %920 = vmatprep.subr.mxu0 %v919
    %v921 = vand.u32 %v101, 4294901760
    %922 = vmatpush2.msra.mxu0 %v921
    %v923 = vand.u32 %v100, 4294901760
    %924 = vmatprep.subr.mxu0 %v923
    %v925 = vand.u32 %v99, 4294901760
    %926 = vmatpush2.msra.mxu0 %v925
    %v927 = vand.u32 %v98, 4294901760
    %928 = vmatprep.subr.mxu0 %v927
    %v929 = vand.u32 %v97, 4294901760
    %930 = vmatpush2.msra.mxu0 %v929
    %v931 = vand.u32 %v96, 4294901760
    %932 = vmatprep.subr.mxu0 %v931
    %v933 = vand.u32 %v95, 4294901760
    %934 = vmatpush2.msra.mxu0 %v933
    %v935 = vand.u32 %v94, 4294901760
    %936 = vmatprep.subr.mxu0 %v935
    %v937 = vand.u32 %v93, 4294901760
    %938 = vmatpush2.msra.mxu0 %v937
    %v939 = vand.u32 %v92, 4294901760
    %940 = vmatprep.subr.mxu0 %v939
    %v941 = vand.u32 %v91, 4294901760
    %942 = vmatpush2.msra.mxu0 %v941
    %v943 = vand.u32 %v90, 4294901760
    %944 = vmatprep.subr.mxu0 %v943
    %v945 = vand.u32 %v89, 4294901760
    %946 = vmatpush2.msra.mxu0 %v945
    %v947 = vand.u32 %v88, 4294901760
    %948 = vmatprep.subr.mxu0 %v947
    %v949 = vand.u32 %v87, 4294901760
    %950 = vmatpush2.msra.mxu0 %v949
    %v951 = vand.u32 %v86, 4294901760
    %952 = vmatprep.subr.mxu0 %v951
    %v953 = vand.u32 %v85, 4294901760
    %954 = vmatpush2.msra.mxu0 %v953
    %v955 = vand.u32 %v84, 4294901760
    %956 = vmatprep.subr.mxu0 %v955
    %v957 = vand.u32 %v83, 4294901760
    %958 = vmatpush2.msra.mxu0 %v957
    %v959 = vand.u32 %v82, 4294901760
    %960 = vmatprep.subr.mxu0 %v959
    %v961 = vand.u32 %v81, 4294901760
    %962 = vmatpush2.msra.mxu0 %v961
    %v963 = vand.u32 %v80, 4294901760
    %964 = vmatprep.subr.mxu0 %v963
    %v965 = vand.u32 %v79, 4294901760
    %966 = vmatpush2.msra.mxu0 %v965
    %v967 = vand.u32 %v78, 4294901760
    %968 = vmatprep.subr.mxu0 %v967
    %v969 = vand.u32 %v77, 4294901760
    %970 = vmatpush2.msra.mxu0 %v969
    %v971 = vand.u32 %v76, 4294901760
    %972 = vmatprep.subr.mxu0 %v971
    %v973 = vand.u32 %v75, 4294901760
    %974 = vmatpush2.msra.mxu0 %v973
    %v975 = vand.u32 %v74, 4294901760
    %976 = vmatprep.subr.mxu0 %v975
    %v977 = vand.u32 %v73, 4294901760
    %978 = vmatpush2.msra.mxu0 %v977
    %v979 = vand.u32 %v72, 4294901760
    %980 = vmatprep.subr.mxu0 %v979
    %v981 = vand.u32 %v71, 4294901760
    %982 = vmatpush2.msra.mxu0 %v981
    %v983 = vand.u32 %v111, 4294901760
    %v984 = vsub.f32 %v111, %v983
    %v985 = vand.u32 %v984, 4294901760
    %986 = vmatprep.mubr.f32.mxu0 %v985
    %v987 = vand.u32 %v110, 4294901760
    %v988 = vsub.f32 %v110, %v987
    %v989 = vand.u32 %v988, 4294901760
    %990 = vmatmul.mubr.f32.gmra.mxu0 %v989
    %v991 = vpop.f32.mrf.mxu0
    %v992 = vadd.f32 %v851, %v991
    %v993 = vpop.f32.mrf.mxu0
    %v994 = vadd.f32 %v853, %v993
    %995 = vdwg.mxu0
    %v996 = vand.u32 %v70, 4294901760
    %v997 = vsub.f32 %v70, %v996
    %v998 = vand.u32 %v997, 4294901760
    %999 = vmatprep.subr.mxu0 %v998
    %v1000 = vand.u32 %v69, 4294901760
    %v1001 = vsub.f32 %v69, %v1000
    %v1002 = vand.u32 %v1001, 4294901760
    %1003 = vmatpush1.msra.mxu0 %v1002
    %v1004 = vand.u32 %v68, 4294901760
    %v1005 = vsub.f32 %v68, %v1004
    %v1006 = vand.u32 %v1005, 4294901760
    %1007 = vmatprep.subr.mxu0 %v1006
    %v1008 = vand.u32 %v67, 4294901760
    %v1009 = vsub.f32 %v67, %v1008
    %v1010 = vand.u32 %v1009, 4294901760
    %1011 = vmatpush1.msra.mxu0 %v1010
    %v1012 = vand.u32 %v66, 4294901760
    %v1013 = vsub.f32 %v66, %v1012
    %v1014 = vand.u32 %v1013, 4294901760
    %1015 = vmatprep.subr.mxu0 %v1014
    %v1016 = vand.u32 %v65, 4294901760
    %v1017 = vsub.f32 %v65, %v1016
    %v1018 = vand.u32 %v1017, 4294901760
    %1019 = vmatpush1.msra.mxu0 %v1018
    %v1020 = vand.u32 %v64, 4294901760
    %v1021 = vsub.f32 %v64, %v1020
    %v1022 = vand.u32 %v1021, 4294901760
    %1023 = vmatprep.subr.mxu0 %v1022
    %v1024 = vand.u32 %v63, 4294901760
    %v1025 = vsub.f32 %v63, %v1024
    %v1026 = vand.u32 %v1025, 4294901760
    %1027 = vmatpush1.msra.mxu0 %v1026
    %v1028 = vand.u32 %v62, 4294901760
    %v1029 = vsub.f32 %v62, %v1028
    %v1030 = vand.u32 %v1029, 4294901760
    %1031 = vmatprep.subr.mxu0 %v1030
    %v1032 = vand.u32 %v61, 4294901760
    %v1033 = vsub.f32 %v61, %v1032
    %v1034 = vand.u32 %v1033, 4294901760
    %1035 = vmatpush1.msra.mxu0 %v1034
    %v1036 = vand.u32 %v60, 4294901760
    %v1037 = vsub.f32 %v60, %v1036
    %v1038 = vand.u32 %v1037, 4294901760
    %1039 = vmatprep.subr.mxu0 %v1038
    %v1040 = vand.u32 %v59, 4294901760
    %v1041 = vsub.f32 %v59, %v1040
    %v1042 = vand.u32 %v1041, 4294901760
    %1043 = vmatpush1.msra.mxu0 %v1042
    %v1044 = vand.u32 %v58, 4294901760
    %v1045 = vsub.f32 %v58, %v1044
    %v1046 = vand.u32 %v1045, 4294901760
    %1047 = vmatprep.subr.mxu0 %v1046
    %v1048 = vand.u32 %v57, 4294901760
    %v1049 = vsub.f32 %v57, %v1048
    %v1050 = vand.u32 %v1049, 4294901760
    %1051 = vmatpush1.msra.mxu0 %v1050
    %v1052 = vand.u32 %v56, 4294901760
    %v1053 = vsub.f32 %v56, %v1052
    %v1054 = vand.u32 %v1053, 4294901760
    %1055 = vmatprep.subr.mxu0 %v1054
    %v1056 = vand.u32 %v55, 4294901760
    %v1057 = vsub.f32 %v55, %v1056
    %v1058 = vand.u32 %v1057, 4294901760
    %1059 = vmatpush1.msra.mxu0 %v1058
    %v1060 = vand.u32 %v54, 4294901760
    %v1061 = vsub.f32 %v54, %v1060
    %v1062 = vand.u32 %v1061, 4294901760
    %1063 = vmatprep.subr.mxu0 %v1062
    %v1064 = vand.u32 %v53, 4294901760
    %v1065 = vsub.f32 %v53, %v1064
    %v1066 = vand.u32 %v1065, 4294901760
    %1067 = vmatpush1.msra.mxu0 %v1066
    %v1068 = vand.u32 %v52, 4294901760
    %v1069 = vsub.f32 %v52, %v1068
    %v1070 = vand.u32 %v1069, 4294901760
    %1071 = vmatprep.subr.mxu0 %v1070
    %v1072 = vand.u32 %v51, 4294901760
    %v1073 = vsub.f32 %v51, %v1072
    %v1074 = vand.u32 %v1073, 4294901760
    %1075 = vmatpush1.msra.mxu0 %v1074
    %v1076 = vand.u32 %v50, 4294901760
    %v1077 = vsub.f32 %v50, %v1076
    %v1078 = vand.u32 %v1077, 4294901760
    %1079 = vmatprep.subr.mxu0 %v1078
    %v1080 = vand.u32 %v49, 4294901760
    %v1081 = vsub.f32 %v49, %v1080
    %v1082 = vand.u32 %v1081, 4294901760
    %1083 = vmatpush1.msra.mxu0 %v1082
    %v1084 = vand.u32 %v48, 4294901760
    %v1085 = vsub.f32 %v48, %v1084
    %v1086 = vand.u32 %v1085, 4294901760
    %1087 = vmatprep.subr.mxu0 %v1086
    %v1088 = vand.u32 %v47, 4294901760
    %v1089 = vsub.f32 %v47, %v1088
    %v1090 = vand.u32 %v1089, 4294901760
    %1091 = vmatpush1.msra.mxu0 %v1090
    %v1092 = vand.u32 %v46, 4294901760
    %v1093 = vsub.f32 %v46, %v1092
    %v1094 = vand.u32 %v1093, 4294901760
    %1095 = vmatprep.subr.mxu0 %v1094
    %v1096 = vand.u32 %v45, 4294901760
    %v1097 = vsub.f32 %v45, %v1096
    %v1098 = vand.u32 %v1097, 4294901760
    %1099 = vmatpush1.msra.mxu0 %v1098
    %v1100 = vand.u32 %v44, 4294901760
    %v1101 = vsub.f32 %v44, %v1100
    %v1102 = vand.u32 %v1101, 4294901760
    %1103 = vmatprep.subr.mxu0 %v1102
    %v1104 = vand.u32 %v43, 4294901760
    %v1105 = vsub.f32 %v43, %v1104
    %v1106 = vand.u32 %v1105, 4294901760
    %1107 = vmatpush1.msra.mxu0 %v1106
    %v1108 = vand.u32 %v42, 4294901760
    %v1109 = vsub.f32 %v42, %v1108
    %v1110 = vand.u32 %v1109, 4294901760
    %1111 = vmatprep.subr.mxu0 %v1110
    %v1112 = vand.u32 %v41, 4294901760
    %v1113 = vsub.f32 %v41, %v1112
    %v1114 = vand.u32 %v1113, 4294901760
    %1115 = vmatpush1.msra.mxu0 %v1114
    %v1116 = vand.u32 %v40, 4294901760
    %v1117 = vsub.f32 %v40, %v1116
    %v1118 = vand.u32 %v1117, 4294901760
    %1119 = vmatprep.subr.mxu0 %v1118
    %v1120 = vand.u32 %v39, 4294901760
    %v1121 = vsub.f32 %v39, %v1120
    %v1122 = vand.u32 %v1121, 4294901760
    %1123 = vmatpush1.msra.mxu0 %v1122
    %v1124 = vand.u32 %v102, 4294901760
    %v1125 = vsub.f32 %v102, %v1124
    %v1126 = vand.u32 %v1125, 4294901760
    %1127 = vmatprep.subr.mxu0 %v1126
    %v1128 = vand.u32 %v101, 4294901760
    %v1129 = vsub.f32 %v101, %v1128
    %v1130 = vand.u32 %v1129, 4294901760
    %1131 = vmatpush2.msra.mxu0 %v1130
    %v1132 = vand.u32 %v100, 4294901760
    %v1133 = vsub.f32 %v100, %v1132
    %v1134 = vand.u32 %v1133, 4294901760
    %1135 = vmatprep.subr.mxu0 %v1134
    %v1136 = vand.u32 %v99, 4294901760
    %v1137 = vsub.f32 %v99, %v1136
    %v1138 = vand.u32 %v1137, 4294901760
    %1139 = vmatpush2.msra.mxu0 %v1138
    %v1140 = vand.u32 %v98, 4294901760
    %v1141 = vsub.f32 %v98, %v1140
    %v1142 = vand.u32 %v1141, 4294901760
    %1143 = vmatprep.subr.mxu0 %v1142
    %v1144 = vand.u32 %v97, 4294901760
    %v1145 = vsub.f32 %v97, %v1144
    %v1146 = vand.u32 %v1145, 4294901760
    %1147 = vmatpush2.msra.mxu0 %v1146
    %v1148 = vand.u32 %v96, 4294901760
    %v1149 = vsub.f32 %v96, %v1148
    %v1150 = vand.u32 %v1149, 4294901760
    %1151 = vmatprep.subr.mxu0 %v1150
    %v1152 = vand.u32 %v95, 4294901760
    %v1153 = vsub.f32 %v95, %v1152
    %v1154 = vand.u32 %v1153, 4294901760
    %1155 = vmatpush2.msra.mxu0 %v1154
    %v1156 = vand.u32 %v94, 4294901760
    %v1157 = vsub.f32 %v94, %v1156
    %v1158 = vand.u32 %v1157, 4294901760
    %1159 = vmatprep.subr.mxu0 %v1158
    %v1160 = vand.u32 %v93, 4294901760
    %v1161 = vsub.f32 %v93, %v1160
    %v1162 = vand.u32 %v1161, 4294901760
    %1163 = vmatpush2.msra.mxu0 %v1162
    %v1164 = vand.u32 %v92, 4294901760
    %v1165 = vsub.f32 %v92, %v1164
    %v1166 = vand.u32 %v1165, 4294901760
    %1167 = vmatprep.subr.mxu0 %v1166
    %v1168 = vand.u32 %v91, 4294901760
    %v1169 = vsub.f32 %v91, %v1168
    %v1170 = vand.u32 %v1169, 4294901760
    %1171 = vmatpush2.msra.mxu0 %v1170
    %v1172 = vand.u32 %v90, 4294901760
    %v1173 = vsub.f32 %v90, %v1172
    %v1174 = vand.u32 %v1173, 4294901760
    %1175 = vmatprep.subr.mxu0 %v1174
    %v1176 = vand.u32 %v89, 4294901760
    %v1177 = vsub.f32 %v89, %v1176
    %v1178 = vand.u32 %v1177, 4294901760
    %1179 = vmatpush2.msra.mxu0 %v1178
    %v1180 = vand.u32 %v88, 4294901760
    %v1181 = vsub.f32 %v88, %v1180
    %v1182 = vand.u32 %v1181, 4294901760
    %1183 = vmatprep.subr.mxu0 %v1182
    %v1184 = vand.u32 %v87, 4294901760
    %v1185 = vsub.f32 %v87, %v1184
    %v1186 = vand.u32 %v1185, 4294901760
    %1187 = vmatpush2.msra.mxu0 %v1186
    %v1188 = vand.u32 %v86, 4294901760
    %v1189 = vsub.f32 %v86, %v1188
    %v1190 = vand.u32 %v1189, 4294901760
    %1191 = vmatprep.subr.mxu0 %v1190
    %v1192 = vand.u32 %v85, 4294901760
    %v1193 = vsub.f32 %v85, %v1192
    %v1194 = vand.u32 %v1193, 4294901760
    %1195 = vmatpush2.msra.mxu0 %v1194
    %v1196 = vand.u32 %v84, 4294901760
    %v1197 = vsub.f32 %v84, %v1196
    %v1198 = vand.u32 %v1197, 4294901760
    %1199 = vmatprep.subr.mxu0 %v1198
    %v1200 = vand.u32 %v83, 4294901760
    %v1201 = vsub.f32 %v83, %v1200
    %v1202 = vand.u32 %v1201, 4294901760
    %1203 = vmatpush2.msra.mxu0 %v1202
    %v1204 = vand.u32 %v82, 4294901760
    %v1205 = vsub.f32 %v82, %v1204
    %v1206 = vand.u32 %v1205, 4294901760
    %1207 = vmatprep.subr.mxu0 %v1206
    %v1208 = vand.u32 %v81, 4294901760
    %v1209 = vsub.f32 %v81, %v1208
    %v1210 = vand.u32 %v1209, 4294901760
    %1211 = vmatpush2.msra.mxu0 %v1210
    %v1212 = vand.u32 %v80, 4294901760
    %v1213 = vsub.f32 %v80, %v1212
    %v1214 = vand.u32 %v1213, 4294901760
    %1215 = vmatprep.subr.mxu0 %v1214
    %v1216 = vand.u32 %v79, 4294901760
    %v1217 = vsub.f32 %v79, %v1216
    %v1218 = vand.u32 %v1217, 4294901760
    %1219 = vmatpush2.msra.mxu0 %v1218
    %v1220 = vand.u32 %v78, 4294901760
    %v1221 = vsub.f32 %v78, %v1220
    %v1222 = vand.u32 %v1221, 4294901760
    %1223 = vmatprep.subr.mxu0 %v1222
    %v1224 = vand.u32 %v77, 4294901760
    %v1225 = vsub.f32 %v77, %v1224
    %v1226 = vand.u32 %v1225, 4294901760
    %1227 = vmatpush2.msra.mxu0 %v1226
    %v1228 = vand.u32 %v76, 4294901760
    %v1229 = vsub.f32 %v76, %v1228
    %v1230 = vand.u32 %v1229, 4294901760
    %1231 = vmatprep.subr.mxu0 %v1230
    %v1232 = vand.u32 %v75, 4294901760
    %v1233 = vsub.f32 %v75, %v1232
    %v1234 = vand.u32 %v1233, 4294901760
    %1235 = vmatpush2.msra.mxu0 %v1234
    %v1236 = vand.u32 %v74, 4294901760
    %v1237 = vsub.f32 %v74, %v1236
    %v1238 = vand.u32 %v1237, 4294901760
    %1239 = vmatprep.subr.mxu0 %v1238
    %v1240 = vand.u32 %v73, 4294901760
    %v1241 = vsub.f32 %v73, %v1240
    %v1242 = vand.u32 %v1241, 4294901760
    %1243 = vmatpush2.msra.mxu0 %v1242
    %v1244 = vand.u32 %v72, 4294901760
    %v1245 = vsub.f32 %v72, %v1244
    %v1246 = vand.u32 %v1245, 4294901760
    %1247 = vmatprep.subr.mxu0 %v1246
    %v1248 = vand.u32 %v71, 4294901760
    %v1249 = vsub.f32 %v71, %v1248
    %v1250 = vand.u32 %v1249, 4294901760
    %1251 = vmatpush2.msra.mxu0 %v1250
    %v1252 = vand.u32 %v111, 4294901760
    %1253 = vmatprep.mubr.f32.mxu0 %v1252
    %v1254 = vand.u32 %v110, 4294901760
    %1255 = vmatmul.mubr.f32.gmra.mxu0 %v1254
    %v1256 = vpop.f32.mrf.mxu0
    %v1257 = vadd.f32 %v992, %v1256
    %v1258 = vpop.f32.mrf.mxu0
    %v1259 = vadd.f32 %v994, %v1258
    %1260 = vdwg.mxu0
    %v1261 = vand.u32 %v70, 4294901760
    %1262 = vmatprep.subr.mxu0 %v1261
    %v1263 = vand.u32 %v69, 4294901760
    %1264 = vmatpush1.msra.mxu0 %v1263
    %v1265 = vand.u32 %v68, 4294901760
    %1266 = vmatprep.subr.mxu0 %v1265
    %v1267 = vand.u32 %v67, 4294901760
    %1268 = vmatpush1.msra.mxu0 %v1267
    %v1269 = vand.u32 %v66, 4294901760
    %1270 = vmatprep.subr.mxu0 %v1269
    %v1271 = vand.u32 %v65, 4294901760
    %1272 = vmatpush1.msra.mxu0 %v1271
    %v1273 = vand.u32 %v64, 4294901760
    %1274 = vmatprep.subr.mxu0 %v1273
    %v1275 = vand.u32 %v63, 4294901760
    %1276 = vmatpush1.msra.mxu0 %v1275
    %v1277 = vand.u32 %v62, 4294901760
    %1278 = vmatprep.subr.mxu0 %v1277
    %v1279 = vand.u32 %v61, 4294901760
    %1280 = vmatpush1.msra.mxu0 %v1279
    %v1281 = vand.u32 %v60, 4294901760
    %1282 = vmatprep.subr.mxu0 %v1281
    %v1283 = vand.u32 %v59, 4294901760
    %1284 = vmatpush1.msra.mxu0 %v1283
    %v1285 = vand.u32 %v58, 4294901760
    %1286 = vmatprep.subr.mxu0 %v1285
    %v1287 = vand.u32 %v57, 4294901760
    %1288 = vmatpush1.msra.mxu0 %v1287
    %v1289 = vand.u32 %v56, 4294901760
    %1290 = vmatprep.subr.mxu0 %v1289
    %v1291 = vand.u32 %v55, 4294901760
    %1292 = vmatpush1.msra.mxu0 %v1291
    %v1293 = vand.u32 %v54, 4294901760
    %1294 = vmatprep.subr.mxu0 %v1293
    %v1295 = vand.u32 %v53, 4294901760
    %1296 = vmatpush1.msra.mxu0 %v1295
    %v1297 = vand.u32 %v52, 4294901760
    %1298 = vmatprep.subr.mxu0 %v1297
    %v1299 = vand.u32 %v51, 4294901760
    %1300 = vmatpush1.msra.mxu0 %v1299
    %v1301 = vand.u32 %v50, 4294901760
    %1302 = vmatprep.subr.mxu0 %v1301
    %v1303 = vand.u32 %v49, 4294901760
    %1304 = vmatpush1.msra.mxu0 %v1303
    %v1305 = vand.u32 %v48, 4294901760
    %1306 = vmatprep.subr.mxu0 %v1305
    %v1307 = vand.u32 %v47, 4294901760
    %1308 = vmatpush1.msra.mxu0 %v1307
    %v1309 = vand.u32 %v46, 4294901760
    %1310 = vmatprep.subr.mxu0 %v1309
    %v1311 = vand.u32 %v45, 4294901760
    %1312 = vmatpush1.msra.mxu0 %v1311
    %v1313 = vand.u32 %v44, 4294901760
    %1314 = vmatprep.subr.mxu0 %v1313
    %v1315 = vand.u32 %v43, 4294901760
    %1316 = vmatpush1.msra.mxu0 %v1315
    %v1317 = vand.u32 %v42, 4294901760
    %1318 = vmatprep.subr.mxu0 %v1317
    %v1319 = vand.u32 %v41, 4294901760
    %1320 = vmatpush1.msra.mxu0 %v1319
    %v1321 = vand.u32 %v40, 4294901760
    %1322 = vmatprep.subr.mxu0 %v1321
    %v1323 = vand.u32 %v39, 4294901760
    %1324 = vmatpush1.msra.mxu0 %v1323
    %v1325 = vand.u32 %v102, 4294901760
    %1326 = vmatprep.subr.mxu0 %v1325
    %v1327 = vand.u32 %v101, 4294901760
    %1328 = vmatpush2.msra.mxu0 %v1327
    %v1329 = vand.u32 %v100, 4294901760
    %1330 = vmatprep.subr.mxu0 %v1329
    %v1331 = vand.u32 %v99, 4294901760
    %1332 = vmatpush2.msra.mxu0 %v1331
    %v1333 = vand.u32 %v98, 4294901760
    %1334 = vmatprep.subr.mxu0 %v1333
    %v1335 = vand.u32 %v97, 4294901760
    %1336 = vmatpush2.msra.mxu0 %v1335
    %v1337 = vand.u32 %v96, 4294901760
    %1338 = vmatprep.subr.mxu0 %v1337
    %v1339 = vand.u32 %v95, 4294901760
    %1340 = vmatpush2.msra.mxu0 %v1339
    %v1341 = vand.u32 %v94, 4294901760
    %1342 = vmatprep.subr.mxu0 %v1341
    %v1343 = vand.u32 %v93, 4294901760
    %1344 = vmatpush2.msra.mxu0 %v1343
    %v1345 = vand.u32 %v92, 4294901760
    %1346 = vmatprep.subr.mxu0 %v1345
    %v1347 = vand.u32 %v91, 4294901760
    %1348 = vmatpush2.msra.mxu0 %v1347
    %v1349 = vand.u32 %v90, 4294901760
    %1350 = vmatprep.subr.mxu0 %v1349
    %v1351 = vand.u32 %v89, 4294901760
    %1352 = vmatpush2.msra.mxu0 %v1351
    %v1353 = vand.u32 %v88, 4294901760
    %1354 = vmatprep.subr.mxu0 %v1353
    %v1355 = vand.u32 %v87, 4294901760
    %1356 = vmatpush2.msra.mxu0 %v1355
    %v1357 = vand.u32 %v86, 4294901760
    %1358 = vmatprep.subr.mxu0 %v1357
    %v1359 = vand.u32 %v85, 4294901760
    %1360 = vmatpush2.msra.mxu0 %v1359
    %v1361 = vand.u32 %v84, 4294901760
    %1362 = vmatprep.subr.mxu0 %v1361
    %v1363 = vand.u32 %v83, 4294901760
    %1364 = vmatpush2.msra.mxu0 %v1363
    %v1365 = vand.u32 %v82, 4294901760
    %1366 = vmatprep.subr.mxu0 %v1365
    %v1367 = vand.u32 %v81, 4294901760
    %1368 = vmatpush2.msra.mxu0 %v1367
    %v1369 = vand.u32 %v80, 4294901760
    %1370 = vmatprep.subr.mxu0 %v1369
    %v1371 = vand.u32 %v79, 4294901760
    %1372 = vmatpush2.msra.mxu0 %v1371
    %v1373 = vand.u32 %v78, 4294901760
    %1374 = vmatprep.subr.mxu0 %v1373
    %v1375 = vand.u32 %v77, 4294901760
    %1376 = vmatpush2.msra.mxu0 %v1375
    %v1377 = vand.u32 %v76, 4294901760
    %1378 = vmatprep.subr.mxu0 %v1377
    %v1379 = vand.u32 %v75, 4294901760
    %1380 = vmatpush2.msra.mxu0 %v1379
    %v1381 = vand.u32 %v74, 4294901760
    %1382 = vmatprep.subr.mxu0 %v1381
    %v1383 = vand.u32 %v73, 4294901760
    %1384 = vmatpush2.msra.mxu0 %v1383
    %v1385 = vand.u32 %v72, 4294901760
    %1386 = vmatprep.subr.mxu0 %v1385
    %v1387 = vand.u32 %v71, 4294901760
    %1388 = vmatpush2.msra.mxu0 %v1387
    %v1389 = vand.u32 %v111, 4294901760
    %1390 = vmatprep.mubr.f32.mxu0 %v1389
    %v1391 = vand.u32 %v110, 4294901760
    %1392 = vmatmul.mubr.f32.gmra.mxu0 %v1391
    %v1393 = vpop.f32.mrf.mxu0
    %v1394 = vadd.f32 %v1257, %v1393
    %v1395 = vpop.f32.mrf.mxu0
    %v1396 = vadd.f32 %v1259, %v1395
    %1397 = vdwg.mxu0
    %v1400 = vcombine.low %v1394, %v1396
    %v1402 = vunpack.c.l.s4 1983009808
    %v1403 = vunpack.c.0.s8 %v1402
    %v1404 = vlaneseq
    %v1405 = vshrl.u32 %v1404, 7
    %v1406 = vsub.s32 %v1403, %v1405
    %v1407 = vrot.slane %v1400, %v1406
    %1409 = vst [vmem:[#allocation7] sm:$0xf] %v1407
    // Predicated region
    $region18: #{tpu_custom_call.1} parent=1 // pred_check
      _
    $region19: #{tpu_custom_call.1} parent=1 // pred_check_branch
      %1411 = sbr.rel (0) target = $region21
    $region20: #{tpu_custom_call.1} parent=1 // pred_region
      %s1413 = ssub.s32 64, 64
      %1414 = vsyncadd [#allocation4], %s1413
      %s1416 = sshll.u32 [#allocation7], 4
      %s1417 = int_to_ptr.vmem [resolvable:$true] %s1416
      %1419 = dma.vmem_to_hbm [thread:$0]  %s1417, 64, %s2, [#allocation4]
    $region21: #{tpu_custom_call.1} parent=1 // pred_fallthru
      _
    // Predicated region
    $region22: #{tpu_custom_call.1} parent=1 // pred_check
      _
    $region23: #{tpu_custom_call.1} parent=1 // pred_check_branch
      %1421 = sbr.rel (0) target = $region25
    $region24: #{tpu_custom_call.1} parent=1 // pred_region
      %1422 = dma.done [#allocation4], 64
    $region25: #{tpu_custom_call.1} parent=1 // pred_fallthru
      _
    %1423 = vsyncpa [#allocation3], 1
    %1424 = vsyncpa [#allocation6], 1
    %1425 = vsyncpa [#allocation4], 1

</llo_original>
